<compile_context>
chip_gen: v7x
topology: tpu7x:2x2x1
jax: 0.10.0
libtpu: 0.0.40
codegen_flags: <defaults>
</compile_context>

<pallas_src>
import functools
import math

import jax
import jax.numpy as jnp
from jax import lax
from jax.experimental import pallas as pl
from jax.experimental.pallas import tpu as pltpu


def make_pos_embedding(d_model: int, embeddings: int = 1000) -> jnp.ndarray:
    """Deterministic construction matching the PyTorch __init__ buffer.

    Handles odd d_model (review correctness concern): the cos half is truncated
    to the floor(d_model/2) available odd columns.
    """
    den = jnp.exp(
        -jnp.arange(0, d_model, 2, dtype=jnp.float32) * math.log(10000.0) / d_model
    )
    pos = jnp.arange(0, embeddings, dtype=jnp.float32).reshape(embeddings, 1)
    arg = pos * den  # (E, ceil(d/2))
    pe = jnp.zeros((embeddings, d_model), dtype=jnp.float32)
    pe = pe.at[:, 0::2].set(jnp.sin(arg))
    pe = pe.at[:, 1::2].set(jnp.cos(arg)[:, : d_model // 2])
    return pe


def _round_up(x: int, m: int) -> int:
    return (x + m - 1) // m * m


def _onehot_gather_kernel(idx_ref, table_ref, out_ref, *, e_max: int):
    """out[b, :] = table[idx[b], :] via one-hot MXU matmul.

    idx_ref:   (tb, 1)  int32, VMEM block of timesteps
    table_ref: (E_pad, D) float32, full table resident in VMEM
    out_ref:   (tb, D)  float32
    """
    tb = idx_ref.shape[0]
    e_pad = table_ref.shape[0]

    # In-kernel clamp (free VPU op); OOB indices map to the last valid row
    # instead of faulting (PyTorch would raise — documented safety tradeoff).
    idx = jnp.clip(idx_ref[...], 0, e_max)                       # (tb, 1)

    col = lax.broadcasted_iota(jnp.int32, (tb, e_pad), 1)        # (tb, E_pad)
    onehot = (idx == col).astype(table_ref.dtype)                # exact 0/1

    out_ref[...] = jnp.dot(
        onehot, table_ref[...], preferred_element_type=jnp.float32
    ).astype(out_ref.dtype)


def _choose_tb(batch: int, block_rows: int) -> int:
    """Batch-block rows: >=2 grid steps for large batches (v7x megacore),
    sublane-aligned (multiple of 8) when tiling, single untiled block otherwise."""
    tb = min(block_rows, _round_up(-(-batch // 2), 8))
    tb = max(tb, 8)
    if tb >= batch:
        return batch  # single block covering everything -> no padding at all
    return tb


def positional_encoding_lookup(
    table: jnp.ndarray, t: jnp.ndarray, *, block_rows: int = 512
) -> jnp.ndarray:
    """out[b, :] = table[t[b], :]  — VMEM-resident table, one-hot MXU gather."""
    assert t.ndim == 1, "this kernel supports 1-D timestep index vectors"
    B = int(t.shape[0])
    E, D = table.shape

    # Pad the table rows to a lane-aligned contraction length (one-time, tiny).
    e_pad = _round_up(E, 128)
    if e_pad != E:
        table = jnp.pad(table, ((0, e_pad - E), (0, 0)))

    t = t.astype(jnp.int32)
    tb = _choose_tb(B, block_rows)
    b_pad = _round_up(B, tb)
    if b_pad != B:
        t = jnp.concatenate([t, jnp.zeros((b_pad - B,), jnp.int32)])
    idx = t.reshape(b_pad, 1)

    grid = (b_pad // tb,)

    grid_spec = pltpu.PrefetchScalarGridSpec(
        num_scalar_prefetch=0,
        grid=grid,
        in_specs=[
            # Per-block index column.
            pl.BlockSpec((tb, 1), lambda i: (i, 0)),
            # Whole table as one block; constant block index => single DMA,
            # stays resident in VMEM across all grid steps.
            pl.BlockSpec((e_pad, D), lambda i: (0, 0)),
        ],
        out_specs=pl.BlockSpec((tb, D), lambda i: (i, 0)),
    )

    out = pl.pallas_call(
        functools.partial(_onehot_gather_kernel, e_max=E - 1),
        out_shape=jax.ShapeDtypeStruct((b_pad, D), table.dtype),
        grid_spec=grid_spec,
        compiler_params=pltpu.CompilerParams(
            # Batch blocks are independent -> shard across v7x's 2 TensorCores.
            dimension_semantics=("parallel",),
        ),
        cost_estimate=pl.CostEstimate(
            flops=2 * b_pad * e_pad * D,
            transcendentals=0,
            bytes_accessed=int(e_pad * D * 4 + b_pad * 4 + b_pad * D * 4),
        ),
    )(idx, table)

    return out[:B] if b_pad != B else out


if __name__ == "__main__":
    d_model = 32
    embeddings = 1000
    batch = 8

    # Deterministic "parameter" (registered buffer) built in-script.
    pos_embedding = make_pos_embedding(d_model, embeddings)

    # Deterministic example timesteps.
    t = jax.random.randint(
        jax.random.PRNGKey(0), (batch,), 0, embeddings, dtype=jnp.int32
    )

    out = jax.block_until_ready(positional_encoding_lookup(pos_embedding, t))

    # Reference check against plain-JAX indexing (== pos_embedding[t] in torch).
    ref = pos_embedding[t]
    assert out.shape == (batch, d_model), out.shape
    assert out.dtype == jnp.float32, out.dtype
    assert bool(jnp.allclose(out, ref)), "mismatch vs reference gather"

    # Exercise the padded / multi-block grid path (grid=(4,), padded 100 -> 128).
    t2 = jax.random.randint(
        jax.random.PRNGKey(1), (100,), 0, embeddings, dtype=jnp.int32
    )
    out2 = jax.block_until_ready(
        positional_encoding_lookup(pos_embedding, t2, block_rows=32)
    )
    assert bool(jnp.allclose(out2, pos_embedding[t2])), "mismatch (tiled path)"

    # Builder guard for odd d_model (review correctness concern).
    assert make_pos_embedding(7, 10).shape == (10, 7)

    print("KERNEL_OK")
</pallas_src>

<mosaic_0001>
module attributes {stable_mosaic.version = 11 : i64} {
  func.func @_onehot_gather_kernel(%arg0: i32, %arg1: memref<8x1xi32, #tpu.memory_space<vmem>>, %arg2: memref<1024x32xf32, #tpu.memory_space<vmem>>, %arg3: memref<8x32xf32, #tpu.memory_space<vmem>>) attributes {dimension_semantics = [#tpu.dimension_semantics<parallel>], iteration_bounds = array<i64: 1>, scalar_prefetch = 0 : i64, scratch_operands = 0 : i64, tpu.core_type = #tpu.core_type<tc>, window_params = [{transform_indices = @transform_0, window_bounds = array<i64: 8, 1>}, {pipeline_mode = #tpu.pipeline_mode<synchronous>, transform_indices = @transform_1, window_bounds = array<i64: 1024, 32>}, {transform_indices = @transform_2, window_bounds = array<i64: 8, 32>}]} {
    %c0 = arith.constant 0 : index
    %c0_0 = arith.constant 0 : index
    %0 = vector.load %arg1[%c0, %c0_0] : memref<8x1xi32, #tpu.memory_space<vmem>>, vector<8x1xi32>
    %c0_i32 = arith.constant 0 : i32
    %c999_i32 = arith.constant 999 : i32
    %1 = vector.broadcast %c0_i32 : i32 to vector<8x1xi32>
    %2 = arith.maxsi %1, %0 : vector<8x1xi32>
    %3 = vector.broadcast %c999_i32 : i32 to vector<8x1xi32>
    %4 = arith.minsi %3, %2 : vector<8x1xi32>
    %5 = tpu.iota {dimensions = array<i32: 1>} : vector<8x1024xi32>
    %6 = vector.broadcast %4 : vector<8x1xi32> to vector<8x1024xi32>
    %7 = arith.cmpi eq, %6, %5 : vector<8x1024xi32>
    %8 = arith.extui %7 : vector<8x1024xi1> to vector<8x1024xi32>
    %9 = arith.sitofp %8 : vector<8x1024xi32> to vector<8x1024xf32>
    %c0_1 = arith.constant 0 : index
    %c0_2 = arith.constant 0 : index
    %10 = vector.load %arg2[%c0_1, %c0_2] : memref<1024x32xf32, #tpu.memory_space<vmem>>, vector<1024x32xf32>
    %cst = arith.constant dense<0.000000e+00> : vector<8x32xf32>
    %11 = tpu.matmul %9, %10, %cst {dimension_numbers = #tpu.dot_dimension_numbers<[1], [0], [0], [1], [0, 0, 1, 1], [], []>} : vector<8x1024xf32>, vector<1024x32xf32>, vector<8x32xf32> -> vector<8x32xf32>
    %c0_3 = arith.constant 0 : index
    %c0_4 = arith.constant 0 : index
    %12 = vector.load %arg3[%c0_3, %c0_4] : memref<8x32xf32, #tpu.memory_space<vmem>>, vector<8x32xf32>
    tpu.vector_store %arg3[%c0_3, %c0_4], %11 {strides = array<i32>} : memref<8x32xf32, #tpu.memory_space<vmem>>, vector<8x32xf32>,
    return
  }
  func.func @transform_0(%arg0: i32) -> (i32, i32) {
    %c0_i32 = arith.constant 0 : i32
    %c0_i32_0 = arith.constant 0 : i32
    return %arg0, %c0_i32 : i32, i32
  }
  func.func @transform_1(%arg0: i32) -> (i32, i32) {
    %c0_i32 = arith.constant 0 : i32
    %c0_i32_0 = arith.constant 0 : i32
    %c0_i32_1 = arith.constant 0 : i32
    return %c0_i32, %c0_i32_0 : i32, i32
  }
  func.func @transform_2(%arg0: i32) -> (i32, i32) {
    %c0_i32 = arith.constant 0 : i32
    %c0_i32_0 = arith.constant 0 : i32
    return %arg0, %c0_i32 : i32, i32
  }
}

</mosaic_0001>

<llo_original>
// kernel: tpu_custom_call.1
$region0: #{tpu_custom_call.1}
  #allocation0 [shape = 'u32[]', space=smem, size = 0x4, offset = 0x4, fixed_abs, tag = 'smem constant byte address 0x4 - core index']
  #allocation1 [shape = 'u32[144,128]{1,0:T(1,128)}', space=vmem, size = 0x12000, scoped, tag = 'internal scratch']
  %s0 = inlined_call_operand.vmem [shape: s32[8,1], index: 0, kind: input, shape index: {}]
  %s1 = inlined_call_operand.vmem [shape: f32[1024,32], index: 1, kind: input, shape index: {}]
  %s2 = inlined_call_operand.hbm [shape: f32[8,32], index: 2, kind: output, shape index: {}]
  %s3 = sld [smem:[#allocation0]]
  $region18: #{tpu_custom_call.1} parent=0
    _
  %s5 = ssub.s32 1, %s3
  %s6 = scalar_select 0, %s5, %s3
  $region1: #{tpu_custom_call.1} parent=0
    #allocation2 [shape = 'u8[4096]{0}', space=vmem, size = 0x1000, scoped, tag = 'output window, operand 0, single buffered']
    #allocation3 [shape = 's32[1]{0}', space=sflag, size = 0x4, scoped, tag = 'scoped memory for tpu_custom_call.1']
    %7 = vsyncpa [#allocation3], 0
    // Predicated region
    $region2: #{tpu_custom_call.1} parent=1 // pred_check
      _
    $region3: #{tpu_custom_call.1} parent=1 // pred_check_branch
      %9 = sbr.rel (0) target = $region5
    $region4: #{tpu_custom_call.1} parent=1 // pred_region
      _
    $region5: #{tpu_custom_call.1} parent=1 // pred_fallthru
      _
    // Predicated region
    $region6: #{tpu_custom_call.1} parent=1 // pred_check
      _
    $region7: #{tpu_custom_call.1} parent=1 // pred_check_branch
      %11 = sbr.rel (0) target = $region9
    $region8: #{tpu_custom_call.1} parent=1 // pred_region
      _
    $region9: #{tpu_custom_call.1} parent=1 // pred_fallthru
      _
    %v12 = vld [vmem:[%s0] sm:$0xff]
    %vm13 = vcmp.gt.s32.totalorder %v12, 0
    %v14 = vsel %vm13, %v12, 0
    %vm15 = vcmp.lt.s32.totalorder %v14, 999
    %v16 = vsel %vm15, %v14, 999
    %v17 = vlaneseq
    %v18 = vand.u32 %v17, 127
    %v19 = vadd.s32 %v18, 128
    %v20 = vadd.s32 %v18, 256
    %v21 = vadd.s32 %v18, 384
    %v22 = vadd.s32 %v18, 512
    %v23 = vadd.s32 %v18, 640
    %v24 = vadd.s32 %v18, 768
    %v25 = vadd.s32 %v18, 896
    %26 = vset.pattern.permute.xlu0 0
    %27 = vperm.xlu0 %26, %v16
    %v28 = vpop.permute.xlu0 %27
    %vm29 = vcmp.eq.s32.totalorder %v28, %v18
    %vm30 = vcmp.eq.s32.totalorder %v28, %v19
    %vm31 = vcmp.eq.s32.totalorder %v28, %v20
    %vm32 = vcmp.eq.s32.totalorder %v28, %v21
    %vm33 = vcmp.eq.s32.totalorder %v28, %v22
    %vm34 = vcmp.eq.s32.totalorder %v28, %v23
    %vm35 = vcmp.eq.s32.totalorder %v28, %v24
    %vm36 = vcmp.eq.s32.totalorder %v28, %v25
    %v37 = vsel %vm29, 1, 0
    %v38 = vsel %vm30, 1, 0
    %v39 = vsel %vm31, 1, 0
    %v40 = vsel %vm32, 1, 0
    %v41 = vsel %vm33, 1, 0
    %v42 = vsel %vm34, 1, 0
    %v43 = vsel %vm35, 1, 0
    %v44 = vsel %vm36, 1, 0
    %v45 = vcvt.s32.f32 %v37
    %v46 = vcvt.s32.f32 %v38
    %v47 = vcvt.s32.f32 %v39
    %v48 = vcvt.s32.f32 %v40
    %v49 = vcvt.s32.f32 %v41
    %v50 = vcvt.s32.f32 %v42
    %v51 = vcvt.s32.f32 %v43
    %v52 = vcvt.s32.f32 %v44
    %v53 = vld [vmem:[%s1] sm:$0xff]
    %v54 = vld [vmem:[%s1 + $0x8] sm:$0xff]
    %v55 = vld [vmem:[%s1 + $0x10] sm:$0xff]
    %v56 = vld [vmem:[%s1 + $0x18] sm:$0xff]
    %v57 = vld [vmem:[%s1 + $0x20] sm:$0xff]
    %v58 = vld [vmem:[%s1 + $0x28] sm:$0xff]
    %v59 = vld [vmem:[%s1 + $0x30] sm:$0xff]
    %v60 = vld [vmem:[%s1 + $0x38] sm:$0xff]
    %v61 = vld [vmem:[%s1 + $0x40] sm:$0xff]
    %v62 = vld [vmem:[%s1 + $0x48] sm:$0xff]
    %v63 = vld [vmem:[%s1 + $0x50] sm:$0xff]
    %v64 = vld [vmem:[%s1 + $0x58] sm:$0xff]
    %v65 = vld [vmem:[%s1 + $0x60] sm:$0xff]
    %v66 = vld [vmem:[%s1 + $0x68] sm:$0xff]
    %v67 = vld [vmem:[%s1 + $0x70] sm:$0xff]
    %v68 = vld [vmem:[%s1 + $0x78] sm:$0xff]
    %v69 = vld [vmem:[%s1 + $0x80] sm:$0xff]
    %v70 = vld [vmem:[%s1 + $0x88] sm:$0xff]
    %v71 = vld [vmem:[%s1 + $0x90] sm:$0xff]
    %v72 = vld [vmem:[%s1 + $0x98] sm:$0xff]
    %v73 = vld [vmem:[%s1 + $0xa0] sm:$0xff]
    %v74 = vld [vmem:[%s1 + $0xa8] sm:$0xff]
    %v75 = vld [vmem:[%s1 + $0xb0] sm:$0xff]
    %v76 = vld [vmem:[%s1 + $0xb8] sm:$0xff]
    %v77 = vld [vmem:[%s1 + $0xc0] sm:$0xff]
    %v78 = vld [vmem:[%s1 + $0xc8] sm:$0xff]
    %v79 = vld [vmem:[%s1 + $0xd0] sm:$0xff]
    %v80 = vld [vmem:[%s1 + $0xd8] sm:$0xff]
    %v81 = vld [vmem:[%s1 + $0xe0] sm:$0xff]
    %v82 = vld [vmem:[%s1 + $0xe8] sm:$0xff]
    %v83 = vld [vmem:[%s1 + $0xf0] sm:$0xff]
    %v84 = vld [vmem:[%s1 + $0xf8] sm:$0xff]
    %v85 = vld [vmem:[%s1 + $0x100] sm:$0xff]
    %v86 = vld [vmem:[%s1 + $0x108] sm:$0xff]
    %v87 = vld [vmem:[%s1 + $0x110] sm:$0xff]
    %v88 = vld [vmem:[%s1 + $0x118] sm:$0xff]
    %v89 = vld [vmem:[%s1 + $0x120] sm:$0xff]
    %v90 = vld [vmem:[%s1 + $0x128] sm:$0xff]
    %v91 = vld [vmem:[%s1 + $0x130] sm:$0xff]
    %v92 = vld [vmem:[%s1 + $0x138] sm:$0xff]
    %v93 = vld [vmem:[%s1 + $0x140] sm:$0xff]
    %v94 = vld [vmem:[%s1 + $0x148] sm:$0xff]
    %v95 = vld [vmem:[%s1 + $0x150] sm:$0xff]
    %v96 = vld [vmem:[%s1 + $0x158] sm:$0xff]
    %v97 = vld [vmem:[%s1 + $0x160] sm:$0xff]
    %v98 = vld [vmem:[%s1 + $0x168] sm:$0xff]
    %v99 = vld [vmem:[%s1 + $0x170] sm:$0xff]
    %v100 = vld [vmem:[%s1 + $0x178] sm:$0xff]
    %v101 = vld [vmem:[%s1 + $0x180] sm:$0xff]
    %v102 = vld [vmem:[%s1 + $0x188] sm:$0xff]
    %v103 = vld [vmem:[%s1 + $0x190] sm:$0xff]
    %v104 = vld [vmem:[%s1 + $0x198] sm:$0xff]
    %v105 = vld [vmem:[%s1 + $0x1a0] sm:$0xff]
    %v106 = vld [vmem:[%s1 + $0x1a8] sm:$0xff]
    %v107 = vld [vmem:[%s1 + $0x1b0] sm:$0xff]
    %v108 = vld [vmem:[%s1 + $0x1b8] sm:$0xff]
    %v109 = vld [vmem:[%s1 + $0x1c0] sm:$0xff]
    %v110 = vld [vmem:[%s1 + $0x1c8] sm:$0xff]
    %v111 = vld [vmem:[%s1 + $0x1d0] sm:$0xff]
    %v112 = vld [vmem:[%s1 + $0x1d8] sm:$0xff]
    %v113 = vld [vmem:[%s1 + $0x1e0] sm:$0xff]
    %v114 = vld [vmem:[%s1 + $0x1e8] sm:$0xff]
    %v115 = vld [vmem:[%s1 + $0x1f0] sm:$0xff]
    %v116 = vld [vmem:[%s1 + $0x1f8] sm:$0xff]
    %v117 = vld [vmem:[%s1 + $0x200] sm:$0xff]
    %v118 = vld [vmem:[%s1 + $0x208] sm:$0xff]
    %v119 = vld [vmem:[%s1 + $0x210] sm:$0xff]
    %v120 = vld [vmem:[%s1 + $0x218] sm:$0xff]
    %v121 = vld [vmem:[%s1 + $0x220] sm:$0xff]
    %v122 = vld [vmem:[%s1 + $0x228] sm:$0xff]
    %v123 = vld [vmem:[%s1 + $0x230] sm:$0xff]
    %v124 = vld [vmem:[%s1 + $0x238] sm:$0xff]
    %v125 = vld [vmem:[%s1 + $0x240] sm:$0xff]
    %v126 = vld [vmem:[%s1 + $0x248] sm:$0xff]
    %v127 = vld [vmem:[%s1 + $0x250] sm:$0xff]
    %v128 = vld [vmem:[%s1 + $0x258] sm:$0xff]
    %v129 = vld [vmem:[%s1 + $0x260] sm:$0xff]
    %v130 = vld [vmem:[%s1 + $0x268] sm:$0xff]
    %v131 = vld [vmem:[%s1 + $0x270] sm:$0xff]
    %v132 = vld [vmem:[%s1 + $0x278] sm:$0xff]
    %v133 = vld [vmem:[%s1 + $0x280] sm:$0xff]
    %v134 = vld [vmem:[%s1 + $0x288] sm:$0xff]
    %v135 = vld [vmem:[%s1 + $0x290] sm:$0xff]
    %v136 = vld [vmem:[%s1 + $0x298] sm:$0xff]
    %v137 = vld [vmem:[%s1 + $0x2a0] sm:$0xff]
    %v138 = vld [vmem:[%s1 + $0x2a8] sm:$0xff]
    %v139 = vld [vmem:[%s1 + $0x2b0] sm:$0xff]
    %v140 = vld [vmem:[%s1 + $0x2b8] sm:$0xff]
    %v141 = vld [vmem:[%s1 + $0x2c0] sm:$0xff]
    %v142 = vld [vmem:[%s1 + $0x2c8] sm:$0xff]
    %v143 = vld [vmem:[%s1 + $0x2d0] sm:$0xff]
    %v144 = vld [vmem:[%s1 + $0x2d8] sm:$0xff]
    %v145 = vld [vmem:[%s1 + $0x2e0] sm:$0xff]
    %v146 = vld [vmem:[%s1 + $0x2e8] sm:$0xff]
    %v147 = vld [vmem:[%s1 + $0x2f0] sm:$0xff]
    %v148 = vld [vmem:[%s1 + $0x2f8] sm:$0xff]
    %v149 = vld [vmem:[%s1 + $0x300] sm:$0xff]
    %v150 = vld [vmem:[%s1 + $0x308] sm:$0xff]
    %v151 = vld [vmem:[%s1 + $0x310] sm:$0xff]
    %v152 = vld [vmem:[%s1 + $0x318] sm:$0xff]
    %v153 = vld [vmem:[%s1 + $0x320] sm:$0xff]
    %v154 = vld [vmem:[%s1 + $0x328] sm:$0xff]
    %v155 = vld [vmem:[%s1 + $0x330] sm:$0xff]
    %v156 = vld [vmem:[%s1 + $0x338] sm:$0xff]
    %v157 = vld [vmem:[%s1 + $0x340] sm:$0xff]
    %v158 = vld [vmem:[%s1 + $0x348] sm:$0xff]
    %v159 = vld [vmem:[%s1 + $0x350] sm:$0xff]
    %v160 = vld [vmem:[%s1 + $0x358] sm:$0xff]
    %v161 = vld [vmem:[%s1 + $0x360] sm:$0xff]
    %v162 = vld [vmem:[%s1 + $0x368] sm:$0xff]
    %v163 = vld [vmem:[%s1 + $0x370] sm:$0xff]
    %v164 = vld [vmem:[%s1 + $0x378] sm:$0xff]
    %v165 = vld [vmem:[%s1 + $0x380] sm:$0xff]
    %v166 = vld [vmem:[%s1 + $0x388] sm:$0xff]
    %v167 = vld [vmem:[%s1 + $0x390] sm:$0xff]
    %v168 = vld [vmem:[%s1 + $0x398] sm:$0xff]
    %v169 = vld [vmem:[%s1 + $0x3a0] sm:$0xff]
    %v170 = vld [vmem:[%s1 + $0x3a8] sm:$0xff]
    %v171 = vld [vmem:[%s1 + $0x3b0] sm:$0xff]
    %v172 = vld [vmem:[%s1 + $0x3b8] sm:$0xff]
    %v173 = vld [vmem:[%s1 + $0x3c0] sm:$0xff]
    %v174 = vld [vmem:[%s1 + $0x3c8] sm:$0xff]
    %v175 = vld [vmem:[%s1 + $0x3d0] sm:$0xff]
    %v176 = vld [vmem:[%s1 + $0x3d8] sm:$0xff]
    %v177 = vld [vmem:[%s1 + $0x3e0] sm:$0xff]
    %v178 = vld [vmem:[%s1 + $0x3e8] sm:$0xff]
    %v179 = vld [vmem:[%s1 + $0x3f0] sm:$0xff]
    %v180 = vld [vmem:[%s1 + $0x3f8] sm:$0xff]
    %181 = vmatprep.subr.mxu0 0.0
    %182 = vmatpush1.msra.mxu0 %v53
    %183 = vmatprep.subr.mxu0 0.0
    %184 = vmatpush1.msra.mxu0 %v54
    %185 = vmatprep.subr.mxu0 0.0
    %186 = vmatpush1.msra.mxu0 %v55
    %187 = vmatprep.subr.mxu0 0.0
    %188 = vmatpush1.msra.mxu0 %v56
    %189 = vmatprep.subr.mxu0 0.0
    %190 = vmatpush1.msra.mxu0 %v57
    %191 = vmatprep.subr.mxu0 0.0
    %192 = vmatpush1.msra.mxu0 %v58
    %193 = vmatprep.subr.mxu0 0.0
    %194 = vmatpush1.msra.mxu0 %v59
    %195 = vmatprep.subr.mxu0 0.0
    %196 = vmatpush1.msra.mxu0 %v60
    %197 = vmatprep.subr.mxu0 0.0
    %198 = vmatpush1.msra.mxu0 %v61
    %199 = vmatprep.subr.mxu0 0.0
    %200 = vmatpush1.msra.mxu0 %v62
    %201 = vmatprep.subr.mxu0 0.0
    %202 = vmatpush1.msra.mxu0 %v63
    %203 = vmatprep.subr.mxu0 0.0
    %204 = vmatpush1.msra.mxu0 %v64
    %205 = vmatprep.subr.mxu0 0.0
    %206 = vmatpush1.msra.mxu0 %v65
    %207 = vmatprep.subr.mxu0 0.0
    %208 = vmatpush1.msra.mxu0 %v66
    %209 = vmatprep.subr.mxu0 0.0
    %210 = vmatpush1.msra.mxu0 %v67
    %211 = vmatprep.subr.mxu0 0.0
    %212 = vmatpush1.msra.mxu0 %v68
    %213 = vmatprep.subr.mxu0 0.0
    %214 = vmatpush1.msra.mxu0 %v69
    %215 = vmatprep.subr.mxu0 0.0
    %216 = vmatpush1.msra.mxu0 %v70
    %217 = vmatprep.subr.mxu0 0.0
    %218 = vmatpush1.msra.mxu0 %v71
    %219 = vmatprep.subr.mxu0 0.0
    %220 = vmatpush1.msra.mxu0 %v72
    %221 = vmatprep.subr.mxu0 0.0
    %222 = vmatpush1.msra.mxu0 %v73
    %223 = vmatprep.subr.mxu0 0.0
    %224 = vmatpush1.msra.mxu0 %v74
    %225 = vmatprep.subr.mxu0 0.0
    %226 = vmatpush1.msra.mxu0 %v75
    %227 = vmatprep.subr.mxu0 0.0
    %228 = vmatpush1.msra.mxu0 %v76
    %229 = vmatprep.subr.mxu0 0.0
    %230 = vmatpush1.msra.mxu0 %v77
    %231 = vmatprep.subr.mxu0 0.0
    %232 = vmatpush1.msra.mxu0 %v78
    %233 = vmatprep.subr.mxu0 0.0
    %234 = vmatpush1.msra.mxu0 %v79
    %235 = vmatprep.subr.mxu0 0.0
    %236 = vmatpush1.msra.mxu0 %v80
    %237 = vmatprep.subr.mxu0 0.0
    %238 = vmatpush1.msra.mxu0 %v81
    %239 = vmatprep.subr.mxu0 0.0
    %240 = vmatpush1.msra.mxu0 %v82
    %241 = vmatprep.subr.mxu0 0.0
    %242 = vmatpush1.msra.mxu0 %v83
    %243 = vmatprep.subr.mxu0 0.0
    %244 = vmatpush1.msra.mxu0 %v84
    %245 = vmatprep.mubr.f32.mxu0 %v46
    %246 = vmatmul.mubr.f32.gmra.mrb[0].mxu0 %v45
    %v247 = vpop.f32.mrb[0].mxu0
    %v248 = vadd.f32 0.0, %v247
    %v249 = vpop.f32.mrb[0].mxu0
    %250 = vdwg.mxu0
    %251 = vmatprep.subr.mxu0 0.0
    %252 = vmatpush1.msra.mxu0 %v85
    %253 = vmatprep.subr.mxu0 0.0
    %254 = vmatpush1.msra.mxu0 %v86
    %255 = vmatprep.subr.mxu0 0.0
    %256 = vmatpush1.msra.mxu0 %v87
    %257 = vmatprep.subr.mxu0 0.0
    %258 = vmatpush1.msra.mxu0 %v88
    %259 = vmatprep.subr.mxu0 0.0
    %260 = vmatpush1.msra.mxu0 %v89
    %261 = vmatprep.subr.mxu0 0.0
    %262 = vmatpush1.msra.mxu0 %v90
    %263 = vmatprep.subr.mxu0 0.0
    %264 = vmatpush1.msra.mxu0 %v91
    %265 = vmatprep.subr.mxu0 0.0
    %266 = vmatpush1.msra.mxu0 %v92
    %267 = vmatprep.subr.mxu0 0.0
    %268 = vmatpush1.msra.mxu0 %v93
    %269 = vmatprep.subr.mxu0 0.0
    %270 = vmatpush1.msra.mxu0 %v94
    %271 = vmatprep.subr.mxu0 0.0
    %272 = vmatpush1.msra.mxu0 %v95
    %273 = vmatprep.subr.mxu0 0.0
    %274 = vmatpush1.msra.mxu0 %v96
    %275 = vmatprep.subr.mxu0 0.0
    %276 = vmatpush1.msra.mxu0 %v97
    %277 = vmatprep.subr.mxu0 0.0
    %278 = vmatpush1.msra.mxu0 %v98
    %279 = vmatprep.subr.mxu0 0.0
    %280 = vmatpush1.msra.mxu0 %v99
    %281 = vmatprep.subr.mxu0 0.0
    %282 = vmatpush1.msra.mxu0 %v100
    %283 = vmatprep.subr.mxu0 0.0
    %284 = vmatpush1.msra.mxu0 %v101
    %285 = vmatprep.subr.mxu0 0.0
    %286 = vmatpush1.msra.mxu0 %v102
    %287 = vmatprep.subr.mxu0 0.0
    %288 = vmatpush1.msra.mxu0 %v103
    %289 = vmatprep.subr.mxu0 0.0
    %290 = vmatpush1.msra.mxu0 %v104
    %291 = vmatprep.subr.mxu0 0.0
    %292 = vmatpush1.msra.mxu0 %v105
    %293 = vmatprep.subr.mxu0 0.0
    %294 = vmatpush1.msra.mxu0 %v106
    %295 = vmatprep.subr.mxu0 0.0
    %296 = vmatpush1.msra.mxu0 %v107
    %297 = vmatprep.subr.mxu0 0.0
    %298 = vmatpush1.msra.mxu0 %v108
    %299 = vmatprep.subr.mxu0 0.0
    %300 = vmatpush1.msra.mxu0 %v109
    %301 = vmatprep.subr.mxu0 0.0
    %302 = vmatpush1.msra.mxu0 %v110
    %303 = vmatprep.subr.mxu0 0.0
    %304 = vmatpush1.msra.mxu0 %v111
    %305 = vmatprep.subr.mxu0 0.0
    %306 = vmatpush1.msra.mxu0 %v112
    %307 = vmatprep.subr.mxu0 0.0
    %308 = vmatpush1.msra.mxu0 %v113
    %309 = vmatprep.subr.mxu0 0.0
    %310 = vmatpush1.msra.mxu0 %v114
    %311 = vmatprep.subr.mxu0 0.0
    %312 = vmatpush1.msra.mxu0 %v115
    %313 = vmatprep.subr.mxu0 0.0
    %314 = vmatpush1.msra.mxu0 %v116
    %315 = vmatprep.mubr.f32.mxu0 %v48
    %316 = vmatmul.mubr.f32.gmra.mrb[0].mxu0 %v47
    %v317 = vpop.f32.mrb[0].mxu0
    %v318 = vadd.f32 %v248, %v317
    %v319 = vpop.f32.mrb[0].mxu0
    %320 = vdwg.mxu0
    %321 = vmatprep.subr.mxu0 0.0
    %322 = vmatpush1.msra.mxu0 %v117
    %323 = vmatprep.subr.mxu0 0.0
    %324 = vmatpush1.msra.mxu0 %v118
    %325 = vmatprep.subr.mxu0 0.0
    %326 = vmatpush1.msra.mxu0 %v119
    %327 = vmatprep.subr.mxu0 0.0
    %328 = vmatpush1.msra.mxu0 %v120
    %329 = vmatprep.subr.mxu0 0.0
    %330 = vmatpush1.msra.mxu0 %v121
    %331 = vmatprep.subr.mxu0 0.0
    %332 = vmatpush1.msra.mxu0 %v122
    %333 = vmatprep.subr.mxu0 0.0
    %334 = vmatpush1.msra.mxu0 %v123
    %335 = vmatprep.subr.mxu0 0.0
    %336 = vmatpush1.msra.mxu0 %v124
    %337 = vmatprep.subr.mxu0 0.0
    %338 = vmatpush1.msra.mxu0 %v125
    %339 = vmatprep.subr.mxu0 0.0
    %340 = vmatpush1.msra.mxu0 %v126
    %341 = vmatprep.subr.mxu0 0.0
    %342 = vmatpush1.msra.mxu0 %v127
    %343 = vmatprep.subr.mxu0 0.0
    %344 = vmatpush1.msra.mxu0 %v128
    %345 = vmatprep.subr.mxu0 0.0
    %346 = vmatpush1.msra.mxu0 %v129
    %347 = vmatprep.subr.mxu0 0.0
    %348 = vmatpush1.msra.mxu0 %v130
    %349 = vmatprep.subr.mxu0 0.0
    %350 = vmatpush1.msra.mxu0 %v131
    %351 = vmatprep.subr.mxu0 0.0
    %352 = vmatpush1.msra.mxu0 %v132
    %353 = vmatprep.subr.mxu0 0.0
    %354 = vmatpush1.msra.mxu0 %v133
    %355 = vmatprep.subr.mxu0 0.0
    %356 = vmatpush1.msra.mxu0 %v134
    %357 = vmatprep.subr.mxu0 0.0
    %358 = vmatpush1.msra.mxu0 %v135
    %359 = vmatprep.subr.mxu0 0.0
    %360 = vmatpush1.msra.mxu0 %v136
    %361 = vmatprep.subr.mxu0 0.0
    %362 = vmatpush1.msra.mxu0 %v137
    %363 = vmatprep.subr.mxu0 0.0
    %364 = vmatpush1.msra.mxu0 %v138
    %365 = vmatprep.subr.mxu0 0.0
    %366 = vmatpush1.msra.mxu0 %v139
    %367 = vmatprep.subr.mxu0 0.0
    %368 = vmatpush1.msra.mxu0 %v140
    %369 = vmatprep.subr.mxu0 0.0
    %370 = vmatpush1.msra.mxu0 %v141
    %371 = vmatprep.subr.mxu0 0.0
    %372 = vmatpush1.msra.mxu0 %v142
    %373 = vmatprep.subr.mxu0 0.0
    %374 = vmatpush1.msra.mxu0 %v143
    %375 = vmatprep.subr.mxu0 0.0
    %376 = vmatpush1.msra.mxu0 %v144
    %377 = vmatprep.subr.mxu0 0.0
    %378 = vmatpush1.msra.mxu0 %v145
    %379 = vmatprep.subr.mxu0 0.0
    %380 = vmatpush1.msra.mxu0 %v146
    %381 = vmatprep.subr.mxu0 0.0
    %382 = vmatpush1.msra.mxu0 %v147
    %383 = vmatprep.subr.mxu0 0.0
    %384 = vmatpush1.msra.mxu0 %v148
    %385 = vmatprep.mubr.f32.mxu0 %v50
    %386 = vmatmul.mubr.f32.gmra.mrb[0].mxu0 %v49
    %v387 = vpop.f32.mrb[0].mxu0
    %v388 = vadd.f32 %v318, %v387
    %v389 = vpop.f32.mrb[0].mxu0
    %390 = vdwg.mxu0
    %391 = vmatprep.subr.mxu0 0.0
    %392 = vmatpush1.msra.mxu0 %v149
    %393 = vmatprep.subr.mxu0 0.0
    %394 = vmatpush1.msra.mxu0 %v150
    %395 = vmatprep.subr.mxu0 0.0
    %396 = vmatpush1.msra.mxu0 %v151
    %397 = vmatprep.subr.mxu0 0.0
    %398 = vmatpush1.msra.mxu0 %v152
    %399 = vmatprep.subr.mxu0 0.0
    %400 = vmatpush1.msra.mxu0 %v153
    %401 = vmatprep.subr.mxu0 0.0
    %402 = vmatpush1.msra.mxu0 %v154
    %403 = vmatprep.subr.mxu0 0.0
    %404 = vmatpush1.msra.mxu0 %v155
    %405 = vmatprep.subr.mxu0 0.0
    %406 = vmatpush1.msra.mxu0 %v156
    %407 = vmatprep.subr.mxu0 0.0
    %408 = vmatpush1.msra.mxu0 %v157
    %409 = vmatprep.subr.mxu0 0.0
    %410 = vmatpush1.msra.mxu0 %v158
    %411 = vmatprep.subr.mxu0 0.0
    %412 = vmatpush1.msra.mxu0 %v159
    %413 = vmatprep.subr.mxu0 0.0
    %414 = vmatpush1.msra.mxu0 %v160
    %415 = vmatprep.subr.mxu0 0.0
    %416 = vmatpush1.msra.mxu0 %v161
    %417 = vmatprep.subr.mxu0 0.0
    %418 = vmatpush1.msra.mxu0 %v162
    %419 = vmatprep.subr.mxu0 0.0
    %420 = vmatpush1.msra.mxu0 %v163
    %421 = vmatprep.subr.mxu0 0.0
    %422 = vmatpush1.msra.mxu0 %v164
    %423 = vmatprep.subr.mxu0 0.0
    %424 = vmatpush1.msra.mxu0 %v165
    %425 = vmatprep.subr.mxu0 0.0
    %426 = vmatpush1.msra.mxu0 %v166
    %427 = vmatprep.subr.mxu0 0.0
    %428 = vmatpush1.msra.mxu0 %v167
    %429 = vmatprep.subr.mxu0 0.0
    %430 = vmatpush1.msra.mxu0 %v168
    %431 = vmatprep.subr.mxu0 0.0
    %432 = vmatpush1.msra.mxu0 %v169
    %433 = vmatprep.subr.mxu0 0.0
    %434 = vmatpush1.msra.mxu0 %v170
    %435 = vmatprep.subr.mxu0 0.0
    %436 = vmatpush1.msra.mxu0 %v171
    %437 = vmatprep.subr.mxu0 0.0
    %438 = vmatpush1.msra.mxu0 %v172
    %439 = vmatprep.subr.mxu0 0.0
    %440 = vmatpush1.msra.mxu0 %v173
    %441 = vmatprep.subr.mxu0 0.0
    %442 = vmatpush1.msra.mxu0 %v174
    %443 = vmatprep.subr.mxu0 0.0
    %444 = vmatpush1.msra.mxu0 %v175
    %445 = vmatprep.subr.mxu0 0.0
    %446 = vmatpush1.msra.mxu0 %v176
    %447 = vmatprep.subr.mxu0 0.0
    %448 = vmatpush1.msra.mxu0 %v177
    %449 = vmatprep.subr.mxu0 0.0
    %450 = vmatpush1.msra.mxu0 %v178
    %451 = vmatprep.subr.mxu0 0.0
    %452 = vmatpush1.msra.mxu0 %v179
    %453 = vmatprep.subr.mxu0 0.0
    %454 = vmatpush1.msra.mxu0 %v180
    %455 = vmatprep.mubr.f32.mxu0 %v52
    %456 = vmatmul.mubr.f32.gmra.mrb[0].mxu0 %v51
    %v457 = vpop.f32.mrb[0].mxu0
    %v458 = vadd.f32 %v388, %v457
    %v459 = vpop.f32.mrb[0].mxu0
    %460 = vdwg.mxu0
    %vm461 = vcmask 261120
    %462 = vst.msk [vmem:[#allocation2] sm:$0xff] %vm461, %v458
    // Predicated region
    $region10: #{tpu_custom_call.1} parent=1 // pred_check
      _
    $region11: #{tpu_custom_call.1} parent=1 // pred_check_branch
      %464 = sbr.rel (0) target = $region13
    $region12: #{tpu_custom_call.1} parent=1 // pred_region
      %s466 = ssub.s32 128, 128
      %467 = vsyncadd [#allocation3], %s466
      %s469 = sshll.u32 [#allocation2], 4
      %s470 = int_to_ptr.vmem [resolvable:$true] %s469
      %472 = dma.vmem_to_hbm [thread:$0]  %s470, 128, %s2, [#allocation3]
    $region13: #{tpu_custom_call.1} parent=1 // pred_fallthru
      _
    // Predicated region
    $region14: #{tpu_custom_call.1} parent=1 // pred_check
      _
    $region15: #{tpu_custom_call.1} parent=1 // pred_check_branch
      %474 = sbr.rel (0) target = $region17
    $region16: #{tpu_custom_call.1} parent=1 // pred_region
      %475 = dma.done [#allocation3], 128
    $region17: #{tpu_custom_call.1} parent=1 // pred_fallthru
      _
    %476 = vsyncpa [#allocation3], 1

</llo_original>
